<compile_context>
chip_gen: v7x
topology: tpu7x:2x2x1
jax: 0.10.0
libtpu: 0.0.40
codegen_flags: <defaults>
</compile_context>

<pallas_src>
import math

import jax
import jax.numpy as jnp
from jax.experimental import pallas as pl
from jax.experimental.pallas import tpu as pltpu


def _round_up(x, m):
    return ((x + m - 1) // m) * m


def _vmem_budget_bytes():
    """~75% of physical per-core VMEM (96 MiB on v5e/v6e, 48 MiB on v7x)."""
    try:
        phys = int(pltpu.get_tpu_info().vmem_capacity_bytes)
    except Exception:
        phys = 128 * 1024 * 1024
    return (phys * 3) // 4


def _select_tiles(M, Ep, Fp, budget):
    """Pick (TM, TF, Mp) so the double-buffered working set fits `budget` bytes."""
    M8 = _round_up(max(M, 1), 8)

    def working_set(TM, TF):
        return (2 * TM * Ep * 2        # x tile, bf16, double-buffered
                + 2 * Ep * TF * 2      # w1 tile, bf16
                + 2 * TF * Ep * 2      # w2 tile, bf16
                + 2 * TM * Ep * 4      # f32 output tile (accumulator)
                + 2 * 8 * TF * 4       # b1 (sublane-padded)
                + 2 * 8 * Ep * 4)      # b2 (sublane-padded)

    # Keep >= 2 token tiles once M is large enough so the "parallel" axis can be
    # sharded across v7x's two TensorCores.
    tm_limit = M8 if M8 < 512 else _round_up((M8 + 1) // 2, 8)
    tm_cands = [t for t in (1024, 768, 512, 384, 256, 128, 64, 32, 16, 8)
                if t <= tm_limit] or [M8]

    # Prefer fully VMEM-resident weights (TF == Fp: constant block index => the
    # full w1/w2 are fetched from HBM exactly once).  Otherwise stream F tiles
    # (weights re-read once per token tile), amortized by a large TM.
    tf_cands = [Fp] + [t for t in (2048, 1024, 512, 256, 128)
                       if t < Fp and Fp % t == 0]

    for TF in tf_cands:
        # Resident weights with a tiny token tile wastes MXU; require a decent TM.
        min_tm = min(256, tm_cands[0]) if TF == Fp else 8
        for TM in tm_cands:               # descending
            if TM < min_tm:
                break
            if working_set(TM, TF) <= budget:
                return TM, TF, _round_up(M8, TM)

    # Last resort (absurdly large E): smallest tiles.
    TM = tm_cands[-1]
    TF = min(128, Fp)
    return TM, TF, _round_up(M8, TM)


def _make_ffn_kernel(approximate_gelu):
    inv_sqrt2 = 1.0 / math.sqrt(2.0)

    def kernel(x_ref, w1_ref, b1_ref, w2_ref, b2_ref, o_ref):
        # x_ref: (TM, Ep) bf16, w1_ref: (Ep, TF) bf16, b1_ref: (1, TF) f32,
        # w2_ref: (TF, Ep) bf16, b2_ref: (1, Ep) f32, o_ref: (TM, Ep) f32.
        # o_ref's block index is constant along the F (reduction) grid axis, so it
        # stays VMEM-resident and doubles as the f32 accumulator (no scratch).
        f = pl.program_id(1)

        @pl.when(f == 0)
        def _():
            o_ref[...] = jnp.zeros_like(o_ref)

        # fc1: bf16 MXU operands, f32 accumulation, bias add in f32.
        h = jnp.dot(x_ref[...], w1_ref[...], preferred_element_type=jnp.float32)
        h = h + b1_ref[...]
        if approximate_gelu:
            # tanh-approx GELU: transcendental goes to the (otherwise idle) EUP slot.
            c = math.sqrt(2.0 / math.pi)
            h = 0.5 * h * (1.0 + jnp.tanh(c * (h + 0.044715 * h * h * h)))
        else:
            # Exact erf GELU (matches torch.nn.functional.gelu default).
            h = 0.5 * h * (1.0 + jax.lax.erf(h * inv_sqrt2))
        # TODO(synk): dropout is identity (inference mode); train-mode dropout would
        #             use pltpu.prng_seed + pltpu.prng_random_bits.

        # fc2 partial product for this F tile: bf16 operands, f32 accumulation.
        o_ref[...] += jnp.dot(h.astype(jnp.bfloat16), w2_ref[...],
                              preferred_element_type=jnp.float32)

        @pl.when(f == pl.num_programs(1) - 1)
        def _():
            o_ref[...] += b2_ref[...]

    return kernel


def prepare_params(w1, b1, w2, b2):
    """One-time pad to lane-dense (multiples of 128) shapes and cast to bf16.

    Hoisted out of the per-call path so each forward call does not re-read and
    re-convert the full E*F weight matrices before the kernel even starts.
    """
    E, F_dim = w1.shape
    Ep = _round_up(E, 128)
    Fp = _round_up(F_dim, 128)
    w1p = jnp.pad(w1, ((0, Ep - E), (0, Fp - F_dim))).astype(jnp.bfloat16)
    w2p = jnp.pad(w2, ((0, Fp - F_dim), (0, Ep - E))).astype(jnp.bfloat16)
    b1p = jnp.pad(b1, (0, Fp - F_dim)).reshape(1, Fp).astype(jnp.float32)
    b2p = jnp.pad(b2, (0, Ep - E)).reshape(1, Ep).astype(jnp.float32)
    return dict(w1=w1p, b1=b1p, w2=w2p, b2=b2p, embed_dim=E, ffn_dim=F_dim)


def feed_forward(x, params, *, approximate_gelu=False):
    """x: (B, S, E) float; params from prepare_params(). Returns (B, S, E)."""
    B, S, E = x.shape
    assert E == params["embed_dim"]
    w1p, b1p, w2p, b2p = params["w1"], params["b1"], params["w2"], params["b2"]
    Ep, Fp = w1p.shape
    M = B * S

    budget = _vmem_budget_bytes()
    TM, TF, Mp = _select_tiles(M, Ep, Fp, budget)

    # Only the activations are padded/cast per call (padding is exact: zero
    # rows/cols contribute nothing and are sliced off at the end).
    x2d = jnp.pad(x.reshape(M, E).astype(jnp.bfloat16), ((0, Mp - M), (0, Ep - E)))

    grid = (Mp // TM, Fp // TF)
    weight_bytes = (w1p.size + w2p.size) * 2                       # bf16
    weight_passes = 1 if TF == Fp else grid[0]                     # resident vs. re-streamed
    cost = pl.CostEstimate(
        flops=4 * Mp * Ep * Fp,                                    # two matmuls
        transcendentals=Mp * Fp,                                   # GELU per hidden element
        bytes_accessed=(x2d.size * 2 + weight_passes * weight_bytes
                        + b1p.size * 4 + b2p.size * 4 + Mp * Ep * 4),
    )

    out2d = pl.pallas_call(
        _make_ffn_kernel(approximate_gelu),
        out_shape=jax.ShapeDtypeStruct((Mp, Ep), jnp.float32),
        grid_spec=pltpu.PrefetchScalarGridSpec(
            num_scalar_prefetch=0,
            grid=grid,
            in_specs=[
                pl.BlockSpec((TM, Ep), lambda i, f: (i, 0)),   # x: new tile per M step
                pl.BlockSpec((Ep, TF), lambda i, f: (0, f)),   # w1 (resident when TF==Fp)
                pl.BlockSpec((1, TF), lambda i, f: (0, f)),    # b1
                pl.BlockSpec((TF, Ep), lambda i, f: (f, 0)),   # w2 (resident when TF==Fp)
                pl.BlockSpec((1, Ep), lambda i, f: (0, 0)),    # b2: resident
            ],
            out_specs=pl.BlockSpec((TM, Ep), lambda i, f: (i, 0)),
        ),
        compiler_params=pltpu.CompilerParams(
            dimension_semantics=("parallel", "arbitrary"),
            vmem_limit_bytes=int(budget),
        ),
        cost_estimate=cost,
    )(x2d, w1p, b1p, w2p, b2p)

    return out2d[:M, :E].astype(x.dtype).reshape(B, S, E)


def init_params(key, embed_dim, ffn_dim):
    """Deterministic init mimicking nn.Linear (uniform +/- 1/sqrt(fan_in))."""
    k1, k2, k3, k4 = jax.random.split(key, 4)
    bound1 = 1.0 / math.sqrt(embed_dim)
    bound2 = 1.0 / math.sqrt(ffn_dim)
    # Weights stored as (in_features, out_features) so the kernel computes x @ W.
    w1 = jax.random.uniform(k1, (embed_dim, ffn_dim), jnp.float32, -bound1, bound1)
    b1 = jax.random.uniform(k2, (ffn_dim,), jnp.float32, -bound1, bound1)
    w2 = jax.random.uniform(k3, (ffn_dim, embed_dim), jnp.float32, -bound2, bound2)
    b2 = jax.random.uniform(k4, (embed_dim,), jnp.float32, -bound2, bound2)
    return w1, b1, w2, b2


if __name__ == "__main__":
    # Small but lane-dense shapes (E, F multiples of 128).
    batch, seq, embed_dim, ffn_dim = 2, 8, 128, 256
    key = jax.random.PRNGKey(0)
    kx, kp = jax.random.split(key)
    x = jax.random.normal(kx, (batch, seq, embed_dim), jnp.float32)
    w1, b1, w2, b2 = init_params(kp, embed_dim, ffn_dim)
    params = prepare_params(w1, b1, w2, b2)

    out = feed_forward(x, params)
    jax.block_until_ready(out)
    assert out.shape == (batch, seq, embed_dim)

    # Reference with the same bf16-operand / f32-accumulate numerics as the kernel.
    xb = x.reshape(-1, embed_dim).astype(jnp.bfloat16)
    h = jnp.dot(xb, w1.astype(jnp.bfloat16), preferred_element_type=jnp.float32) + b1
    h = 0.5 * h * (1.0 + jax.lax.erf(h * (1.0 / math.sqrt(2.0))))
    ref = jnp.dot(h.astype(jnp.bfloat16), w2.astype(jnp.bfloat16),
                  preferred_element_type=jnp.float32) + b2
    ref = ref.reshape(batch, seq, embed_dim)
    assert jnp.allclose(out, ref, atol=2e-3, rtol=2e-3), float(jnp.max(jnp.abs(out - ref)))

    # Loose sanity check against the full-f32 reference (bf16 quantization slack).
    ref32 = jax.nn.gelu(x @ w1 + b1, approximate=False) @ w2 + b2
    assert jnp.allclose(out, ref32, atol=1e-1, rtol=1e-1)

    print("KERNEL_OK")
</pallas_src>

<mosaic_0001>
module attributes {stable_mosaic.version = 11 : i64} {
  func.func @kernel(%arg0: i32, %arg1: i32, %arg2: memref<16x128xbf16, #tpu.memory_space<vmem>>, %arg3: memref<128x256xbf16, #tpu.memory_space<vmem>>, %arg4: memref<1x256xf32, #tpu.memory_space<vmem>>, %arg5: memref<256x128xbf16, #tpu.memory_space<vmem>>, %arg6: memref<1x128xf32, #tpu.memory_space<vmem>>, %arg7: memref<16x128xf32, #tpu.memory_space<vmem>>) attributes {dimension_semantics = [#tpu.dimension_semantics<parallel>, #tpu.dimension_semantics<arbitrary>], iteration_bounds = array<i64: 1, 1>, scalar_prefetch = 0 : i64, scratch_operands = 0 : i64, tpu.core_type = #tpu.core_type<tc>, window_params = [{transform_indices = @transform_0, window_bounds = array<i64: 16, 128>}, {transform_indices = @transform_1, window_bounds = array<i64: 128, 256>}, {transform_indices = @transform_2, window_bounds = array<i64: 1, 256>}, {transform_indices = @transform_3, window_bounds = array<i64: 256, 128>}, {pipeline_mode = #tpu.pipeline_mode<synchronous>, transform_indices = @transform_4, window_bounds = array<i64: 1, 128>}, {transform_indices = @transform_5, window_bounds = array<i64: 16, 128>}]} {
    %c0_i32 = arith.constant 0 : i32
    %0 = arith.cmpi eq, %arg1, %c0_i32 : i32
    %1 = arith.extui %0 : i1 to i32
    %c0_i32_0 = arith.constant 0 : i32
    %2 = arith.cmpi ne, %1, %c0_i32_0 : i32
    scf.if %2 {
      %cst_18 = arith.constant 0.000000e+00 : f32
      %26 = vector.broadcast %cst_18 : f32 to vector<16x128xf32>
      %c0_19 = arith.constant 0 : index
      %c0_20 = arith.constant 0 : index
      %27 = vector.load %arg7[%c0_19, %c0_20] : memref<16x128xf32, #tpu.memory_space<vmem>>, vector<16x128xf32>
      tpu.vector_store %arg7[%c0_19, %c0_20], %26 {strides = array<i32>} : memref<16x128xf32, #tpu.memory_space<vmem>>, vector<16x128xf32>,
    } else {
    }
    %c0 = arith.constant 0 : index
    %c0_1 = arith.constant 0 : index
    %3 = vector.load %arg2[%c0, %c0_1] : memref<16x128xbf16, #tpu.memory_space<vmem>>, vector<16x128xbf16>
    %c0_2 = arith.constant 0 : index
    %c0_3 = arith.constant 0 : index
    %4 = vector.load %arg3[%c0_2, %c0_3] : memref<128x256xbf16, #tpu.memory_space<vmem>>, vector<128x256xbf16>
    %cst = arith.constant dense<0.000000e+00> : vector<16x256xf32>
    %5 = tpu.matmul %3, %4, %cst {dimension_numbers = #tpu.dot_dimension_numbers<[1], [0], [0], [1], [0, 0, 1, 1], [], []>} : vector<16x128xbf16>, vector<128x256xbf16>, vector<16x256xf32> -> vector<16x256xf32>
    %c0_4 = arith.constant 0 : index
    %c0_5 = arith.constant 0 : index
    %6 = vector.load %arg4[%c0_4, %c0_5] : memref<1x256xf32, #tpu.memory_space<vmem>>, vector<1x256xf32>
    %7 = vector.broadcast %6 : vector<1x256xf32> to vector<16x256xf32>
    %8 = arith.addf %5, %7 : vector<16x256xf32>
    %cst_6 = arith.constant 5.000000e-01 : f32
    %9 = vector.broadcast %cst_6 : f32 to vector<16x256xf32>
    %10 = arith.mulf %9, %8 : vector<16x256xf32>
    %cst_7 = arith.constant 0.707106769 : f32
    %11 = vector.broadcast %cst_7 : f32 to vector<16x256xf32>
    %12 = arith.mulf %8, %11 : vector<16x256xf32>
    %13 = math.erf %12 : vector<16x256xf32>
    %cst_8 = arith.constant 1.000000e+00 : f32
    %14 = vector.broadcast %cst_8 : f32 to vector<16x256xf32>
    %15 = arith.addf %14, %13 : vector<16x256xf32>
    %16 = arith.mulf %10, %15 : vector<16x256xf32>
    %c0_9 = arith.constant 0 : index
    %c0_10 = arith.constant 0 : index
    %17 = vector.load %arg7[%c0_9, %c0_10] : memref<16x128xf32, #tpu.memory_space<vmem>>, vector<16x128xf32>
    %18 = arith.truncf %16 : vector<16x256xf32> to vector<16x256xbf16>
    %c0_11 = arith.constant 0 : index
    %c0_12 = arith.constant 0 : index
    %19 = vector.load %arg5[%c0_11, %c0_12] : memref<256x128xbf16, #tpu.memory_space<vmem>>, vector<256x128xbf16>
    %cst_13 = arith.constant dense<0.000000e+00> : vector<16x128xf32>
    %20 = tpu.matmul %18, %19, %cst_13 {dimension_numbers = #tpu.dot_dimension_numbers<[1], [0], [0], [1], [0, 0, 1, 1], [], []>} : vector<16x256xbf16>, vector<256x128xbf16>, vector<16x128xf32> -> vector<16x128xf32>
    %21 = arith.addf %17, %20 : vector<16x128xf32>
    %c0_14 = arith.constant 0 : index
    %c0_15 = arith.constant 0 : index
    %22 = vector.load %arg7[%c0_14, %c0_15] : memref<16x128xf32, #tpu.memory_space<vmem>>, vector<16x128xf32>
    tpu.vector_store %arg7[%c0_14, %c0_15], %21 {strides = array<i32>} : memref<16x128xf32, #tpu.memory_space<vmem>>, vector<16x128xf32>,
    %c0_i32_16 = arith.constant 0 : i32
    %23 = arith.cmpi eq, %arg1, %c0_i32_16 : i32
    %24 = arith.extui %23 : i1 to i32
    %c0_i32_17 = arith.constant 0 : i32
    %25 = arith.cmpi ne, %24, %c0_i32_17 : i32
    scf.if %25 {
      %c0_18 = arith.constant 0 : index
      %c0_19 = arith.constant 0 : index
      %26 = vector.load %arg7[%c0_18, %c0_19] : memref<16x128xf32, #tpu.memory_space<vmem>>, vector<16x128xf32>
      %c0_20 = arith.constant 0 : index
      %c0_21 = arith.constant 0 : index
      %27 = vector.load %arg6[%c0_20, %c0_21] : memref<1x128xf32, #tpu.memory_space<vmem>>, vector<1x128xf32>
      %28 = vector.broadcast %27 : vector<1x128xf32> to vector<16x128xf32>
      %29 = arith.addf %26, %28 : vector<16x128xf32>
      %c0_22 = arith.constant 0 : index
      %c0_23 = arith.constant 0 : index
      %30 = vector.load %arg7[%c0_22, %c0_23] : memref<16x128xf32, #tpu.memory_space<vmem>>, vector<16x128xf32>
      tpu.vector_store %arg7[%c0_22, %c0_23], %29 {strides = array<i32>} : memref<16x128xf32, #tpu.memory_space<vmem>>, vector<16x128xf32>,
    } else {
    }
    return
  }
  func.func @transform_0(%arg0: i32, %arg1: i32) -> (i32, i32) {
    %c0_i32 = arith.constant 0 : i32
    %c0_i32_0 = arith.constant 0 : i32
    return %arg0, %c0_i32 : i32, i32
  }
  func.func @transform_1(%arg0: i32, %arg1: i32) -> (i32, i32) {
    %c0_i32 = arith.constant 0 : i32
    %c0_i32_0 = arith.constant 0 : i32
    return %c0_i32, %arg1 : i32, i32
  }
  func.func @transform_2(%arg0: i32, %arg1: i32) -> (i32, i32) {
    %c0_i32 = arith.constant 0 : i32
    %c0_i32_0 = arith.constant 0 : i32
    return %c0_i32, %arg1 : i32, i32
  }
  func.func @transform_3(%arg0: i32, %arg1: i32) -> (i32, i32) {
    %c0_i32 = arith.constant 0 : i32
    %c0_i32_0 = arith.constant 0 : i32
    return %arg1, %c0_i32 : i32, i32
  }
  func.func @transform_4(%arg0: i32, %arg1: i32) -> (i32, i32) {
    %c0_i32 = arith.constant 0 : i32
    %c0_i32_0 = arith.constant 0 : i32
    %c0_i32_1 = arith.constant 0 : i32
    return %c0_i32, %c0_i32_0 : i32, i32
  }
  func.func @transform_5(%arg0: i32, %arg1: i32) -> (i32, i32) {
    %c0_i32 = arith.constant 0 : i32
    %c0_i32_0 = arith.constant 0 : i32
    return %arg0, %c0_i32 : i32, i32
  }
}

</mosaic_0001>

<llo_original>
// kernel: tpu_custom_call.1
$region0: #{tpu_custom_call.1}
  #allocation0 [shape = 'u32[]', space=smem, size = 0x4, offset = 0x4, fixed_abs, tag = 'smem constant byte address 0x4 - core index']
  #allocation1 [shape = 'u32[144,128]{1,0:T(1,128)}', space=vmem, size = 0x12000, scoped, tag = 'internal scratch']
  %s0 = inlined_call_operand.hbm [shape: bf16[16,128], index: 0, kind: input, shape index: {}]
  %s1 = inlined_call_operand.hbm [shape: bf16[128,256], index: 1, kind: input, shape index: {}]
  %s2 = inlined_call_operand.hbm [shape: f32[1,256], index: 2, kind: input, shape index: {}]
  %s3 = inlined_call_operand.hbm [shape: bf16[256,128], index: 3, kind: input, shape index: {}]
  %s4 = inlined_call_operand.hbm [shape: f32[1,128], index: 4, kind: input, shape index: {}]
  %s5 = inlined_call_operand.hbm [shape: f32[16,128], index: 5, kind: output, shape index: {}]
  %s6 = sld [smem:[#allocation0]]
  $region58: #{tpu_custom_call.1} parent=0
    _
  %s8 = ssub.s32 1, %s6
  %s9 = scalar_select 0, %s8, %s6
  $region1: #{tpu_custom_call.1} parent=0
    #allocation2 [shape = 'u8[4096]{0}', space=vmem, size = 0x1000, scoped, tag = 'input window, operand 0, single buffered']
    #allocation3 [shape = 's32[1]{0}', space=sflag, size = 0x4, scoped, tag = 'scoped memory for tpu_custom_call.1']
    #allocation4 [shape = 's32[1]{0}', space=sflag, size = 0x4, scoped, tag = 'scoped memory for tpu_custom_call.1']
    #allocation5 [shape = 'u8[65536]{0}', space=vmem, size = 0x10000, scoped, tag = 'input window, operand 1, single buffered']
    #allocation6 [shape = 's32[1]{0}', space=sflag, size = 0x4, scoped, tag = 'scoped memory for tpu_custom_call.1']
    #allocation7 [shape = 'u8[1024]{0}', space=vmem, size = 0x400, scoped, tag = 'input window, operand 2, single buffered']
    #allocation8 [shape = 'u8[65536]{0}', space=vmem, size = 0x10000, scoped, tag = 'input window, operand 3, single buffered']
    #allocation9 [shape = 's32[1]{0}', space=sflag, size = 0x4, scoped, tag = 'scoped memory for tpu_custom_call.1']
    #allocation10 [shape = 'u8[512]{0}', space=vmem, size = 0x400, scoped, tag = 'input window, operand 4, single buffered']
    #allocation11 [shape = 'u8[8192]{0}', space=vmem, size = 0x2000, scoped, tag = 'output window, operand 0, single buffered']
    %10 = vsyncpa [#allocation3], 0
    %11 = vsyncpa [#allocation6], 0
    %12 = vsyncpa [#allocation9], 0
    %13 = vsyncpa [#allocation4], 0
    // Predicated region
    $region2: #{tpu_custom_call.1} parent=1 // pred_check
      _
    $region3: #{tpu_custom_call.1} parent=1 // pred_check_branch
      %15 = sbr.rel (0) target = $region5
    $region4: #{tpu_custom_call.1} parent=1 // pred_region
      %s17 = ssub.s32 128, 128
      %18 = vsyncadd [#allocation3], %s17
      %s19 = sshll.u32 [#allocation2], 4
      %s20 = int_to_ptr.vmem [resolvable:$true] %s19
      %25 = dma.hbm_to_vmem [thread:$0]  %s0, 128, %s20, [#allocation3], 64, 64, 4
    $region5: #{tpu_custom_call.1} parent=1 // pred_fallthru
      _
    // Predicated region
    $region6: #{tpu_custom_call.1} parent=1 // pred_check
      _
    $region7: #{tpu_custom_call.1} parent=1 // pred_check_branch
      %27 = sbr.rel (0) target = $region9
    $region8: #{tpu_custom_call.1} parent=1 // pred_region
      %s29 = ssub.s32 2048, 2048
      %30 = vsyncadd [#allocation6], %s29
      %s31 = sshll.u32 [#allocation5], 4
      %s32 = int_to_ptr.vmem [resolvable:$true] %s31
      %37 = dma.hbm_to_vmem [thread:$0]  %s1, 2048, %s32, [#allocation6], 128, 128, 8
    $region9: #{tpu_custom_call.1} parent=1 // pred_fallthru
      _
    // Predicated region
    $region10: #{tpu_custom_call.1} parent=1 // pred_check
      _
    $region11: #{tpu_custom_call.1} parent=1 // pred_check_branch
      %39 = sbr.rel (0) target = $region13
    $region12: #{tpu_custom_call.1} parent=1 // pred_region
      %s41 = ssub.s32 32, 32
      %42 = vsyncadd [#allocation6], %s41
      %s44 = sshll.u32 [#allocation7], 4
      %s45 = int_to_ptr.vmem [resolvable:$true] %s44
      %47 = dma.hbm_to_vmem [thread:$0]  %s2, 32, %s45, [#allocation6]
    $region13: #{tpu_custom_call.1} parent=1 // pred_fallthru
      _
    // Predicated region
    $region14: #{tpu_custom_call.1} parent=1 // pred_check
      _
    $region15: #{tpu_custom_call.1} parent=1 // pred_check_branch
      %49 = sbr.rel (0) target = $region17
    $region16: #{tpu_custom_call.1} parent=1 // pred_region
      %s51 = ssub.s32 2048, 2048
      %52 = vsyncadd [#allocation9], %s51
      %s53 = sshll.u32 [#allocation8], 4
      %s54 = int_to_ptr.vmem [resolvable:$true] %s53
      %59 = dma.hbm_to_vmem [thread:$0]  %s3, 2048, %s54, [#allocation9], 64, 64, 4
    $region17: #{tpu_custom_call.1} parent=1 // pred_fallthru
      _
    // Predicated region
    $region18: #{tpu_custom_call.1} parent=1 // pred_check
      _
    $region19: #{tpu_custom_call.1} parent=1 // pred_check_branch
      %61 = sbr.rel (0) target = $region21
    $region20: #{tpu_custom_call.1} parent=1 // pred_region
      %s63 = ssub.s32 16, 16
      %64 = vsyncadd [#allocation9], %s63
      %s66 = sshll.u32 [#allocation10], 4
      %s67 = int_to_ptr.vmem [resolvable:$true] %s66
      %69 = dma.hbm_to_vmem [thread:$0]  %s4, 16, %s67, [#allocation9]
    $region21: #{tpu_custom_call.1} parent=1 // pred_fallthru
      _
    // Predicated region
    $region22: #{tpu_custom_call.1} parent=1 // pred_check
      _
    $region23: #{tpu_custom_call.1} parent=1 // pred_check_branch
      %71 = sbr.rel (0) target = $region25
    $region24: #{tpu_custom_call.1} parent=1 // pred_region
      %72 = dma.done [#allocation3], 128
    $region25: #{tpu_custom_call.1} parent=1 // pred_fallthru
      _
    // Predicated region
    $region26: #{tpu_custom_call.1} parent=1 // pred_check
      _
    $region27: #{tpu_custom_call.1} parent=1 // pred_check_branch
      %74 = sbr.rel (0) target = $region29
    $region28: #{tpu_custom_call.1} parent=1 // pred_region
      %75 = dma.done [#allocation6], 2048
    $region29: #{tpu_custom_call.1} parent=1 // pred_fallthru
      _
    // Predicated region
    $region30: #{tpu_custom_call.1} parent=1 // pred_check
      _
    $region31: #{tpu_custom_call.1} parent=1 // pred_check_branch
      %77 = sbr.rel (0) target = $region33
    $region32: #{tpu_custom_call.1} parent=1 // pred_region
      %78 = dma.done [#allocation6], 32
    $region33: #{tpu_custom_call.1} parent=1 // pred_fallthru
      _
    // Predicated region
    $region34: #{tpu_custom_call.1} parent=1 // pred_check
      _
    $region35: #{tpu_custom_call.1} parent=1 // pred_check_branch
      %80 = sbr.rel (0) target = $region37
    $region36: #{tpu_custom_call.1} parent=1 // pred_region
      %81 = dma.done [#allocation9], 2048
    $region37: #{tpu_custom_call.1} parent=1 // pred_fallthru
      _
    // Predicated region
    $region38: #{tpu_custom_call.1} parent=1 // pred_check
      _
    $region39: #{tpu_custom_call.1} parent=1 // pred_check_branch
      %83 = sbr.rel (0) target = $region41
    $region40: #{tpu_custom_call.1} parent=1 // pred_region
      %84 = dma.done [#allocation9], 16
    $region41: #{tpu_custom_call.1} parent=1 // pred_fallthru
      _
    %p86 = scmp.eq.s32.totalorder 0, 0
    // Predicated region
    $region42: #{tpu_custom_call.1} parent=1 // pred_check
      %p87 = pneg %p86
    $region43: #{tpu_custom_call.1} parent=1 // pred_check_branch
      %89 = sbr.rel (%p87) target = $region45
    $region44: #{tpu_custom_call.1} parent=1 // pred_region
      %90 = vst [vmem:[#allocation11] sm:$0xff] 0.0
      %91 = vst [vmem:[#allocation11 + $0x8] sm:$0xff] 0.0
    $region45: #{tpu_custom_call.1} parent=1 // pred_fallthru
      _
    %v92 = vld [vmem:[#allocation2] sm:$0xf]
    %v93 = vld [vmem:[#allocation2 + $0x4] sm:$0xf]
    %v94 = vld [vmem:[#allocation5] sm:$0xff]
    %v95 = vld [vmem:[#allocation5 + $0x8] sm:$0xff]
    %v96 = vld [vmem:[#allocation5 + $0x10] sm:$0xff]
    %v97 = vld [vmem:[#allocation5 + $0x18] sm:$0xff]
    %v98 = vld [vmem:[#allocation5 + $0x20] sm:$0xff]
    %v99 = vld [vmem:[#allocation5 + $0x28] sm:$0xff]
    %v100 = vld [vmem:[#allocation5 + $0x30] sm:$0xff]
    %v101 = vld [vmem:[#allocation5 + $0x38] sm:$0xff]
    %v102 = vld [vmem:[#allocation5 + $0x40] sm:$0xff]
    %v103 = vld [vmem:[#allocation5 + $0x48] sm:$0xff]
    %v104 = vld [vmem:[#allocation5 + $0x50] sm:$0xff]
    %v105 = vld [vmem:[#allocation5 + $0x58] sm:$0xff]
    %v106 = vld [vmem:[#allocation5 + $0x60] sm:$0xff]
    %v107 = vld [vmem:[#allocation5 + $0x68] sm:$0xff]
    %v108 = vld [vmem:[#allocation5 + $0x70] sm:$0xff]
    %v109 = vld [vmem:[#allocation5 + $0x78] sm:$0xff]
    %v110 = vld [vmem:[#allocation7] sm:$0x3]
    %v112 = vlaneseq
    %v113 = vshrl.u32 %v112, 7
    %v114 = vsub.s32 0, %v113
    %v115 = vrot.slane %v110, %v114
    %v116 = vlaneseq
    %v117 = vshrl.u32 %v116, 7
    %v118 = vsub.s32 1, %v117
    %v119 = vrot.slane %v110, %v118
    %v124 = vunpack.c.l.b16 %v92
    %v125 = vunpack.c.l.b16 %v93
    %v126 = vpack.c.b16 %v125, %v124
    %v144 = vunpack.c.l.b16 %v94
    %v145 = vunpack.c.h.b16 %v94
    %v146 = vunpack.c.l.b16 %v95
    %v147 = vunpack.c.h.b16 %v95
    %v148 = vunpack.c.l.b16 %v96
    %v149 = vunpack.c.h.b16 %v96
    %v150 = vunpack.c.l.b16 %v97
    %v151 = vunpack.c.h.b16 %v97
    %v152 = vunpack.c.l.b16 %v98
    %v153 = vunpack.c.h.b16 %v98
    %v154 = vunpack.c.l.b16 %v99
    %v155 = vunpack.c.h.b16 %v99
    %v156 = vunpack.c.l.b16 %v100
    %v157 = vunpack.c.h.b16 %v100
    %v158 = vunpack.c.l.b16 %v101
    %v159 = vunpack.c.h.b16 %v101
    %v160 = vunpack.c.l.b16 %v102
    %v161 = vunpack.c.h.b16 %v102
    %v162 = vunpack.c.l.b16 %v103
    %v163 = vunpack.c.h.b16 %v103
    %v164 = vunpack.c.l.b16 %v104
    %v165 = vunpack.c.h.b16 %v104
    %v166 = vunpack.c.l.b16 %v105
    %v167 = vunpack.c.h.b16 %v105
    %v168 = vunpack.c.l.b16 %v106
    %v169 = vunpack.c.h.b16 %v106
    %v170 = vunpack.c.l.b16 %v107
    %v171 = vunpack.c.h.b16 %v107
    %v172 = vunpack.c.l.b16 %v108
    %v173 = vunpack.c.h.b16 %v108
    %v174 = vunpack.c.l.b16 %v109
    %v175 = vunpack.c.h.b16 %v109
    %v176 = vpack.c.b16 %v146, %v144
    %v177 = vpack.c.b16 %v147, %v145
    %v178 = vpack.c.b16 %v150, %v148
    %v179 = vpack.c.b16 %v151, %v149
    %v180 = vpack.c.b16 %v154, %v152
    %v181 = vpack.c.b16 %v155, %v153
    %v182 = vpack.c.b16 %v158, %v156
    %v183 = vpack.c.b16 %v159, %v157
    %v184 = vpack.c.b16 %v162, %v160
    %v185 = vpack.c.b16 %v163, %v161
    %v186 = vpack.c.b16 %v166, %v164
    %v187 = vpack.c.b16 %v167, %v165
    %v188 = vpack.c.b16 %v170, %v168
    %v189 = vpack.c.b16 %v171, %v169
    %v190 = vpack.c.b16 %v174, %v172
    %v191 = vpack.c.b16 %v175, %v173
    %208 = vmatprep.subr.bf16.mxu0 %v177
    %209 = vmatpush1.bf16.msra.mxu0 %v176
    %210 = vmatprep.subr.bf16.mxu0 %v179
    %211 = vmatpush1.bf16.msra.mxu0 %v178
    %212 = vmatprep.subr.bf16.mxu0 %v181
    %213 = vmatpush1.bf16.msra.mxu0 %v180
    %214 = vmatprep.subr.bf16.mxu0 %v183
    %215 = vmatpush1.bf16.msra.mxu0 %v182
    %216 = vmatprep.subr.bf16.mxu0 %v185
    %217 = vmatpush1.bf16.msra.mxu0 %v184
    %218 = vmatprep.subr.bf16.mxu0 %v187
    %219 = vmatpush1.bf16.msra.mxu0 %v186
    %220 = vmatprep.subr.bf16.mxu0 %v189
    %221 = vmatpush1.bf16.msra.mxu0 %v188
    %222 = vmatprep.subr.bf16.mxu0 %v191
    %223 = vmatpush1.bf16.msra.mxu0 %v190
    %224 = vmatprep.subr.bf16.mxu0 0
    %225 = vmatpush1.bf16.msra.mxu0 0
    %226 = vmatprep.subr.bf16.mxu0 0
    %227 = vmatpush1.bf16.msra.mxu0 0
    %228 = vmatprep.subr.bf16.mxu0 0
    %229 = vmatpush1.bf16.msra.mxu0 0
    %230 = vmatprep.subr.bf16.mxu0 0
    %231 = vmatpush1.bf16.msra.mxu0 0
    %232 = vmatprep.subr.bf16.mxu0 0
    %233 = vmatpush1.bf16.msra.mxu0 0
    %234 = vmatprep.subr.bf16.mxu0 0
    %235 = vmatpush1.bf16.msra.mxu0 0
    %236 = vmatprep.subr.bf16.mxu0 0
    %237 = vmatpush1.bf16.msra.mxu0 0
    %238 = vmatprep.subr.bf16.mxu0 0
    %239 = vmatpush1.bf16.msra.mxu0 0
    %240 = vmatprep.mubr.bf16.mxu0 0
    %241 = vmatmul.mubr.bf16.gmra.mrb[0].mxu0 %v126
    %v242 = vpop.f32.mrb[0].mxu0
    %v243 = vadd.f32 %v115, %v242
    %v244 = vpop.f32.mrb[0].mxu0
    %v245 = vadd.f32 %v119, %v244
    %v246 = vpop.f32.mrb[0].mxu0
    %v247 = vadd.f32 %v115, %v246
    %v248 = vpop.f32.mrb[0].mxu0
    %v249 = vadd.f32 %v119, %v248
    %250 = vdwg.mxu0
    %v251 = vmul.f32 %v243, 0.5
    %v252 = vmul.f32 %v245, 0.5
    %v253 = vmul.f32 %v247, 0.5
    %v254 = vmul.f32 %v249, 0.5
    %v255 = vmul.f32 %v243, 0.70710677
    %v256 = vmul.f32 %v245, 0.70710677
    %v257 = vmul.f32 %v247, 0.70710677
    %v258 = vmul.f32 %v249, 0.70710677
    %v259 = verf.f32.pop %v255
    %v260 = verf.f32.pop %v256
    %v261 = verf.f32.pop %v257
    %v262 = verf.f32.pop %v258
    %v263 = vadd.f32 %v259, 1.0
    %v264 = vadd.f32 %v260, 1.0
    %v265 = vadd.f32 %v261, 1.0
    %v266 = vadd.f32 %v262, 1.0
    %v267 = vmul.f32 %v251, %v263
    %v268 = vmul.f32 %v252, %v264
    %v269 = vmul.f32 %v253, %v265
    %v270 = vmul.f32 %v254, %v266
    %v271 = vld [vmem:[#allocation11] sm:$0xff]
    %v272 = vld [vmem:[#allocation11 + $0x8] sm:$0xff]
    %v273 = vpack.c.bf16 %v269, %v267
    %v274 = vpack.c.bf16 %v270, %v268
    %v275 = vld [vmem:[#allocation8] sm:$0xf]
    %v276 = vld [vmem:[#allocation8 + $0x4] sm:$0xf]
    %v277 = vld [vmem:[#allocation8 + $0x8] sm:$0xf]
    %v278 = vld [vmem:[#allocation8 + $0xc] sm:$0xf]
    %v279 = vld [vmem:[#allocation8 + $0x10] sm:$0xf]
    %v280 = vld [vmem:[#allocation8 + $0x14] sm:$0xf]
    %v281 = vld [vmem:[#allocation8 + $0x18] sm:$0xf]
    %v282 = vld [vmem:[#allocation8 + $0x1c] sm:$0xf]
    %v283 = vld [vmem:[#allocation8 + $0x20] sm:$0xf]
    %v284 = vld [vmem:[#allocation8 + $0x24] sm:$0xf]
    %v285 = vld [vmem:[#allocation8 + $0x28] sm:$0xf]
    %v286 = vld [vmem:[#allocation8 + $0x2c] sm:$0xf]
    %v287 = vld [vmem:[#allocation8 + $0x30] sm:$0xf]
    %v288 = vld [vmem:[#allocation8 + $0x34] sm:$0xf]
    %v289 = vld [vmem:[#allocation8 + $0x38] sm:$0xf]
    %v290 = vld [vmem:[#allocation8 + $0x3c] sm:$0xf]
    %v291 = vld [vmem:[#allocation8 + $0x40] sm:$0xf]
    %v292 = vld [vmem:[#allocation8 + $0x44] sm:$0xf]
    %v293 = vld [vmem:[#allocation8 + $0x48] sm:$0xf]
    %v294 = vld [vmem:[#allocation8 + $0x4c] sm:$0xf]
    %v295 = vld [vmem:[#allocation8 + $0x50] sm:$0xf]
    %v296 = vld [vmem:[#allocation8 + $0x54] sm:$0xf]
    %v297 = vld [vmem:[#allocation8 + $0x58] sm:$0xf]
    %v298 = vld [vmem:[#allocation8 + $0x5c] sm:$0xf]
    %v299 = vld [vmem:[#allocation8 + $0x60] sm:$0xf]
    %v300 = vld [vmem:[#allocation8 + $0x64] sm:$0xf]
    %v301 = vld [vmem:[#allocation8 + $0x68] sm:$0xf]
    %v302 = vld [vmem:[#allocation8 + $0x6c] sm:$0xf]
    %v303 = vld [vmem:[#allocation8 + $0x70] sm:$0xf]
    %v304 = vld [vmem:[#allocation8 + $0x74] sm:$0xf]
    %v305 = vld [vmem:[#allocation8 + $0x78] sm:$0xf]
    %v306 = vld [vmem:[#allocation8 + $0x7c] sm:$0xf]
    %v339 = vunpack.c.l.b16 %v275
    %v340 = vunpack.c.l.b16 %v276
    %v341 = vunpack.c.l.b16 %v277
    %v342 = vunpack.c.l.b16 %v278
    %v343 = vunpack.c.l.b16 %v279
    %v344 = vunpack.c.l.b16 %v280
    %v345 = vunpack.c.l.b16 %v281
    %v346 = vunpack.c.l.b16 %v282
    %v347 = vunpack.c.l.b16 %v283
    %v348 = vunpack.c.l.b16 %v284
    %v349 = vunpack.c.l.b16 %v285
    %v350 = vunpack.c.l.b16 %v286
    %v351 = vunpack.c.l.b16 %v287
    %v352 = vunpack.c.l.b16 %v288
    %v353 = vunpack.c.l.b16 %v289
    %v354 = vunpack.c.l.b16 %v290
    %v355 = vunpack.c.l.b16 %v291
    %v356 = vunpack.c.l.b16 %v292
    %v357 = vunpack.c.l.b16 %v293
    %v358 = vunpack.c.l.b16 %v294
    %v359 = vunpack.c.l.b16 %v295
    %v360 = vunpack.c.l.b16 %v296
    %v361 = vunpack.c.l.b16 %v297
    %v362 = vunpack.c.l.b16 %v298
    %v363 = vunpack.c.l.b16 %v299
    %v364 = vunpack.c.l.b16 %v300
    %v365 = vunpack.c.l.b16 %v301
    %v366 = vunpack.c.l.b16 %v302
    %v367 = vunpack.c.l.b16 %v303
    %v368 = vunpack.c.l.b16 %v304
    %v369 = vunpack.c.l.b16 %v305
    %v370 = vunpack.c.l.b16 %v306
    %v371 = vpack.c.b16 %v340, %v339
    %v372 = vpack.c.b16 %v342, %v341
    %v373 = vpack.c.b16 %v344, %v343
    %v374 = vpack.c.b16 %v346, %v345
    %v375 = vpack.c.b16 %v348, %v347
    %v376 = vpack.c.b16 %v350, %v349
    %v377 = vpack.c.b16 %v352, %v351
    %v378 = vpack.c.b16 %v354, %v353
    %v379 = vpack.c.b16 %v356, %v355
    %v380 = vpack.c.b16 %v358, %v357
    %v381 = vpack.c.b16 %v360, %v359
    %v382 = vpack.c.b16 %v362, %v361
    %v383 = vpack.c.b16 %v364, %v363
    %v384 = vpack.c.b16 %v366, %v365
    %v385 = vpack.c.b16 %v368, %v367
    %v386 = vpack.c.b16 %v370, %v369
    %403 = vmatprep.subr.bf16.mxu0 0
    %404 = vmatpush1.bf16.msra.mxu0 %v371
    %405 = vmatprep.subr.bf16.mxu0 0
    %406 = vmatpush1.bf16.msra.mxu0 %v372
    %407 = vmatprep.subr.bf16.mxu0 0
    %408 = vmatpush1.bf16.msra.mxu0 %v373
    %409 = vmatprep.subr.bf16.mxu0 0
    %410 = vmatpush1.bf16.msra.mxu0 %v374
    %411 = vmatprep.subr.bf16.mxu0 0
    %412 = vmatpush1.bf16.msra.mxu0 %v375
    %413 = vmatprep.subr.bf16.mxu0 0
    %414 = vmatpush1.bf16.msra.mxu0 %v376
    %415 = vmatprep.subr.bf16.mxu0 0
    %416 = vmatpush1.bf16.msra.mxu0 %v377
    %417 = vmatprep.subr.bf16.mxu0 0
    %418 = vmatpush1.bf16.msra.mxu0 %v378
    %419 = vmatprep.subr.bf16.mxu0 0
    %420 = vmatpush1.bf16.msra.mxu0 %v379
    %421 = vmatprep.subr.bf16.mxu0 0
    %422 = vmatpush1.bf16.msra.mxu0 %v380
    %423 = vmatprep.subr.bf16.mxu0 0
    %424 = vmatpush1.bf16.msra.mxu0 %v381
    %425 = vmatprep.subr.bf16.mxu0 0
    %426 = vmatpush1.bf16.msra.mxu0 %v382
    %427 = vmatprep.subr.bf16.mxu0 0
    %428 = vmatpush1.bf16.msra.mxu0 %v383
    %429 = vmatprep.subr.bf16.mxu0 0
    %430 = vmatpush1.bf16.msra.mxu0 %v384
    %431 = vmatprep.subr.bf16.mxu0 0
    %432 = vmatpush1.bf16.msra.mxu0 %v385
    %433 = vmatprep.subr.bf16.mxu0 0
    %434 = vmatpush1.bf16.msra.mxu0 %v386
    %435 = vmatprep.mubr.bf16.mxu0 %v274
    %436 = vmatmul.mubr.bf16.gmra.mrb[0].mxu0 %v273
    %v437 = vpop.f32.mrb[0].mxu0
    %v438 = vadd.f32 0.0, %v437
    %v439 = vpop.f32.mrb[0].mxu0
    %v440 = vpop.f32.mrb[0].mxu0
    %v441 = vadd.f32 0.0, %v440
    %v442 = vpop.f32.mrb[0].mxu0
    %443 = vdwg.mxu0
    %v444 = vadd.f32 %v271, %v438
    %v445 = vadd.f32 %v272, %v441
    %446 = vst [vmem:[#allocation11] sm:$0xff] %v444
    %447 = vst [vmem:[#allocation11 + $0x8] sm:$0xff] %v445
    // Predicated region
    $region46: #{tpu_custom_call.1} parent=1 // pred_check
      %p448 = pneg %p86
    $region47: #{tpu_custom_call.1} parent=1 // pred_check_branch
      %450 = sbr.rel (%p448) target = $region49
    $region48: #{tpu_custom_call.1} parent=1 // pred_region
      %v451 = vld [vmem:[#allocation11] sm:$0xff]
      %v452 = vld [vmem:[#allocation11 + $0x8] sm:$0xff]
      %v453 = vld [vmem:[#allocation10] sm:$0x1]
      %v455 = vlaneseq
      %v456 = vshrl.u32 %v455, 7
      %v457 = vsub.s32 0, %v456
      %v458 = vrot.slane %v453, %v457
      %v460 = vadd.f32 %v451, %v458
      %v461 = vadd.f32 %v452, %v458
      %462 = vst [vmem:[#allocation11] sm:$0xff] %v460
      %463 = vst [vmem:[#allocation11 + $0x8] sm:$0xff] %v461
    $region49: #{tpu_custom_call.1} parent=1 // pred_fallthru
      _
    // Predicated region
    $region50: #{tpu_custom_call.1} parent=1 // pred_check
      _
    $region51: #{tpu_custom_call.1} parent=1 // pred_check_branch
      %465 = sbr.rel (0) target = $region53
    $region52: #{tpu_custom_call.1} parent=1 // pred_region
      %s467 = ssub.s32 256, 256
      %468 = vsyncadd [#allocation4], %s467
      %s469 = sshll.u32 [#allocation11], 4
      %s470 = int_to_ptr.vmem [resolvable:$true] %s469
      %475 = dma.vmem_to_hbm [thread:$0]  %s470, 256, %s5, [#allocation4], 128, 128, 8
    $region53: #{tpu_custom_call.1} parent=1 // pred_fallthru
      _
    // Predicated region
    $region54: #{tpu_custom_call.1} parent=1 // pred_check
      _
    $region55: #{tpu_custom_call.1} parent=1 // pred_check_branch
      %477 = sbr.rel (0) target = $region57
    $region56: #{tpu_custom_call.1} parent=1 // pred_region
      %478 = dma.done [#allocation4], 256
    $region57: #{tpu_custom_call.1} parent=1 // pred_fallthru
      _
    %479 = vsyncpa [#allocation3], 1
    %480 = vsyncpa [#allocation6], 1
    %481 = vsyncpa [#allocation9], 1
    %482 = vsyncpa [#allocation4], 1

</llo_original>
